<compile_context>
chip_gen: v5e
topology: v5e:2x2
jax: 0.10.0
libtpu: 0.0.40
codegen_flags: <defaults>
</compile_context>

<pallas_src>
import functools

import jax
import jax.numpy as jnp
from jax import lax
from jax.experimental import pallas as pl
from jax.experimental.pallas import tpu as pltpu


def _cat_fuse_kernel(x_ref, halo_ref, w_ref, scale_ref, shift_ref, o_ref, *,
                     kernel_size, pad, negative_slope, use_im2col, block_n,
                     halo_resident):
    """One grid step = (batch block n, length tile l).

    x_ref    : (BN, C_in, TL)             main input tile (input dtype)
    halo_ref : (BN, NL, C_in, 2*pad)      resident halos (or (BN,1,C_in,2*pad))
    w_ref    : im2col: (C_out_p, K*C_in) bf16 (row order k*C_in + ci)
               else  : (K, C_out_p, C_in) bf16
    scale_ref: (C_out_p, 1) f32           folded BN scale
    shift_ref: (C_out_p, 1) f32           folded BN shift (includes conv bias)
    o_ref    : (BN, C_out_p, TL)
    """
    c_in = x_ref.shape[1]
    tl = o_ref.shape[2]
    hl = pl.program_id(1) if halo_resident else 0

    # Lane index, hoisted (JAX does not CSE broadcast_in_dim).
    lane = lax.broadcasted_iota(jnp.int32, (c_in, tl), 1)

    for b in range(block_n):
        main = x_ref[b].astype(jnp.float32)                   # (C_in, TL)
        halo = halo_ref[b, hl].astype(jnp.float32)            # (C_in, 2*pad)
        # Halo columns parked in lanes [0, 2*pad); rolled into place per tap below.
        halo_park = jnp.concatenate(
            [halo, jnp.zeros((c_in, tl - 2 * pad), jnp.float32)], axis=-1)

        taps = []
        for k in range(kernel_size):
            d = k - pad                                        # tap offset
            sm = (-d) % tl
            rolled = pltpu.roll(main, sm, axis=1) if sm else main
            if d == 0:
                tap = rolled
            else:
                sh = (-(pad + d)) % tl
                hrolled = pltpu.roll(halo_park, sh, axis=1) if sh else halo_park
                if d < 0:
                    use_halo = lane < (-d)
                else:
                    use_halo = lane >= (tl - d)
                tap = jnp.where(use_halo, hrolled, rolled)
            taps.append(tap.astype(jnp.bfloat16))

        if use_im2col:
            # Single MXU contraction over K*C_in (better depth fill for small C_in).
            patches = jnp.concatenate(taps, axis=0)            # (K*C_in, TL)
            acc = jnp.dot(w_ref[...], patches,
                          preferred_element_type=jnp.float32)  # (C_out_p, TL)
        else:
            # TODO(synk): pair adjacent taps (2*C_in contraction) to fill the
            #             256-deep MXU on v6e/v7x when this path is compute-bound.
            acc = jnp.zeros((o_ref.shape[1], tl), jnp.float32)
            for k in range(kernel_size):                       # unrolled at trace time
                acc = acc + jnp.dot(w_ref[k], taps[k],
                                    preferred_element_type=jnp.float32)

        # Fused BatchNorm (eval-mode affine) + LeakyReLU, in f32.
        y = acc * scale_ref[...] + shift_ref[...]
        y = jnp.where(y >= 0, y, negative_slope * y)
        o_ref[b, :, :] = y.astype(o_ref.dtype)


def _vmem_limit_bytes():
    """Scoped VMEM limit derived from the chip's VMEM capacity (generation aware)."""
    cap = 64 << 20
    try:
        info = pltpu.get_tpu_info()
        cap = int(getattr(info, "vmem_capacity_bytes", cap))
    except Exception:
        pass
    frac = 0.55 if cap <= (64 << 20) else 0.72
    return min(int(cap * frac), 100 << 20)


def _plan_tiles(N, C_in, C_out_p, L, K, x_itemsize, out_itemsize, vmem_limit,
                tile_l=None):
    """Pick (TL, L_pad, NL, BN): big per-step tiles that still fit scoped VMEM."""
    pad_l128 = ((max(L, 1) + 127) // 128) * 128
    w_bytes = K * max(C_in, 128) * max(C_out_p, 8) * 2          # resident bf16 weights
    budget = max(4 << 20, int(vmem_limit * 0.5) - 2 * w_bytes)
    per_col = (2 * C_in * x_itemsize          # double-buffered x block
               + 2 * C_out_p * out_itemsize   # double-buffered out block
               + 8 * C_in                     # main + parked halo (f32)
               + 2 * K * C_in                 # bf16 taps / im2col patches
               + 4 * C_out_p)                 # f32 accumulator
    max_cols = max(128, (budget // max(per_col, 1)) // 128 * 128)

    if tile_l is not None:
        TL = int(tile_l)
        if TL % 128 != 0:
            raise ValueError("tile_l must be a multiple of 128")
    else:
        TL = min(pad_l128, max_cols)

    L_pad = ((L + TL - 1) // TL) * TL
    NL = L_pad // TL

    BN = 1
    if tile_l is None and NL == 1 and N > 1:
        max_bn = min(8, max(1, max_cols // TL))
        for d in range(2, min(N, max_bn) + 1):
            # keep >= 2 grid steps so both v7x TensorCores get work
            if N % d == 0 and (N // d) >= 2:
                BN = d
    return TL, L_pad, NL, BN


def cat_fuse_forward(x_ncl, conv_w, conv_b, bn_gamma, bn_beta, bn_mean, bn_var, *,
                     eps=1e-5, negative_slope=0.2, tile_l=None, out_dtype=None):
    """x_ncl: (N, C_in, L) like PyTorch. Returns (N, C_out, L) in `out_dtype`
    (defaults to x.dtype; pass bf16 x / out_dtype=bf16 to halve HBM traffic)."""
    N, C_in, L = x_ncl.shape
    C_out, C_in_w, K = conv_w.shape
    assert C_in_w == C_in
    assert K % 2 == 1 and K > 1
    pad = (K - 1) // 2
    if out_dtype is None:
        out_dtype = x_ncl.dtype
    C_out_p = ((C_out + 7) // 8) * 8          # pad for unmasked sublane stores

    vmem_limit = _vmem_limit_bytes()
    TL, L_pad, NL, BN = _plan_tiles(
        N, C_in, C_out_p, L, K,
        jnp.dtype(x_ncl.dtype).itemsize, jnp.dtype(out_dtype).itemsize,
        vmem_limit, tile_l=tile_l)

    # Zero-pad L to a tile multiple (zero padding == Conv1d zero padding).
    xp = x_ncl if L_pad == L else jnp.pad(x_ncl, ((0, 0), (0, 0), (0, L_pad - L)))

    # Halo side input: the 2*pad columns just outside each L tile, zeros out of range.
    starts = jnp.arange(NL, dtype=jnp.int32) * TL
    idx = jnp.concatenate(
        [starts[:, None] + jnp.arange(-pad, 0, dtype=jnp.int32),
         starts[:, None] + TL + jnp.arange(0, pad, dtype=jnp.int32)],
        axis=-1)                                                  # (NL, 2*pad)
    valid = (idx >= 0) & (idx < L_pad)
    halo = jnp.take(xp, jnp.clip(idx, 0, L_pad - 1).reshape(-1), axis=2)
    halo = halo.reshape(N, C_in, NL, 2 * pad)
    halo = jnp.where(valid.reshape(1, 1, NL, 2 * pad), halo, 0)
    halo = jnp.transpose(halo, (0, 2, 1, 3)).astype(xp.dtype)     # (N, NL, C_in, 2p)

    # Keep the whole per-batch-block halo resident unless it would be large.
    halo_block_bytes = (BN * NL * (((C_in + 7) // 8) * 8) * 128
                        * jnp.dtype(xp.dtype).itemsize)
    halo_resident = halo_block_bytes <= (2 << 20)
    if halo_resident:
        halo_spec = pl.BlockSpec((BN, NL, C_in, 2 * pad), lambda n, l: (n, 0, 0, 0))
    else:
        halo_spec = pl.BlockSpec((BN, 1, C_in, 2 * pad), lambda n, l: (n, l, 0, 0))

    # --- weights (bf16, C_out padded) ---
    use_im2col = C_in <= 64
    if use_im2col:
        w = jnp.transpose(conv_w, (0, 2, 1)).reshape(C_out, K * C_in)
        w = jnp.pad(w, ((0, C_out_p - C_out), (0, 0))).astype(jnp.bfloat16)
        w_spec = pl.BlockSpec((C_out_p, K * C_in), lambda n, l: (0, 0))
    else:
        w = jnp.transpose(conv_w, (2, 0, 1))                       # (K, C_out, C_in)
        w = jnp.pad(w, ((0, 0), (0, C_out_p - C_out), (0, 0))).astype(jnp.bfloat16)
        w_spec = pl.BlockSpec((K, C_out_p, C_in), lambda n, l: (0, 0, 0))

    # --- fold conv bias + eval-mode BN into per-channel scale/shift (f32) ---
    inv_std = 1.0 / jnp.sqrt(bn_var.astype(jnp.float32) + eps)
    scale = bn_gamma.astype(jnp.float32) * inv_std
    shift = (bn_beta.astype(jnp.float32)
             + (conv_b.astype(jnp.float32) - bn_mean.astype(jnp.float32))
             * bn_gamma.astype(jnp.float32) * inv_std)
    scale = jnp.pad(scale, (0, C_out_p - C_out)).reshape(C_out_p, 1)
    shift = jnp.pad(shift, (0, C_out_p - C_out)).reshape(C_out_p, 1)

    kernel = functools.partial(
        _cat_fuse_kernel, kernel_size=K, pad=pad, negative_slope=negative_slope,
        use_im2col=use_im2col, block_n=BN, halo_resident=halo_resident)

    out = pl.pallas_call(
        kernel,
        out_shape=jax.ShapeDtypeStruct((N, C_out_p, L_pad), out_dtype),
        grid_spec=pltpu.PrefetchScalarGridSpec(
            num_scalar_prefetch=0,
            grid=(N // BN, NL),
            in_specs=[
                pl.BlockSpec((BN, C_in, TL), lambda n, l: (n, 0, l)),
                halo_spec,
                w_spec,
                pl.BlockSpec((C_out_p, 1), lambda n, l: (0, 0)),
                pl.BlockSpec((C_out_p, 1), lambda n, l: (0, 0)),
            ],
            out_specs=pl.BlockSpec((BN, C_out_p, TL), lambda n, l: (n, 0, l)),
        ),
        compiler_params=pltpu.CompilerParams(
            dimension_semantics=("parallel", "parallel"),
            vmem_limit_bytes=vmem_limit,
        ),
    )(xp, halo, w, scale, shift)

    if C_out_p != C_out or L_pad != L:
        out = out[:, :C_out, :L]
    return out


def _reference(x_ncl, conv_w, conv_b, bn_gamma, bn_beta, bn_mean, bn_var, *,
               eps=1e-5, negative_slope=0.2):
    """Pure-JAX (f32) reference, same semantics as the PyTorch module in eval mode."""
    K = conv_w.shape[-1]
    pad = (K - 1) // 2
    y = lax.conv_general_dilated(
        x_ncl, conv_w, window_strides=(1,), padding=((pad, pad),),
        dimension_numbers=("NCH", "OIH", "NCH"),
    ) + conv_b[None, :, None]
    inv_std = 1.0 / jnp.sqrt(bn_var + eps)
    y = (y - bn_mean[None, :, None]) * (bn_gamma * inv_std)[None, :, None] \
        + bn_beta[None, :, None]
    return jnp.where(y >= 0, y, negative_slope * y)


if __name__ == "__main__":
    def _run_case(key, N, C_in, C_out, L, K=7, tile_l=None):
        kx, kw, kb, kg, kbeta, km, kv = jax.random.split(key, 7)
        x = jax.random.normal(kx, (N, C_in, L), dtype=jnp.float32)
        conv_w = jax.random.normal(kw, (C_out, C_in, K), dtype=jnp.float32) * 0.1
        conv_b = jax.random.normal(kb, (C_out,), dtype=jnp.float32) * 0.1
        bn_gamma = 1.0 + 0.1 * jax.random.normal(kg, (C_out,), dtype=jnp.float32)
        bn_beta = 0.1 * jax.random.normal(kbeta, (C_out,), dtype=jnp.float32)
        bn_mean = 0.1 * jax.random.normal(km, (C_out,), dtype=jnp.float32)
        bn_var = jnp.abs(jax.random.normal(kv, (C_out,), dtype=jnp.float32)) + 0.5

        out = cat_fuse_forward(x, conv_w, conv_b, bn_gamma, bn_beta, bn_mean, bn_var,
                               tile_l=tile_l)
        out = jax.block_until_ready(out)
        ref = _reference(x, conv_w, conv_b, bn_gamma, bn_beta, bn_mean, bn_var)
        assert out.shape == (N, C_out, L)
        # Inputs hit the MXU in bf16 (f32 accumulation) -> bf16-appropriate tolerance.
        err = float(jnp.max(jnp.abs(out - ref)))
        scl = float(jnp.max(jnp.abs(ref))) + 1e-6
        assert err / scl < 5e-2, (err, scl)

    root = jax.random.PRNGKey(0)
    k1, k2, k3, k4 = jax.random.split(root, 4)
    # Small shapes per the module: im2col path, C_out padding (4->8), L padding 16->128.
    _run_case(k1, N=2, C_in=8, C_out=4, L=16)
    # Batch blocking: single L tile, 2 batch elements per grid step.
    _run_case(k2, N=4, C_in=8, C_out=8, L=256)
    # Multi-tile L: interior (non-zero) halos + roll/mask window fix-up.
    _run_case(k3, N=2, C_in=8, C_out=8, L=384, tile_l=128)
    # Wide channels: K-shifted matmul path.
    _run_case(k4, N=2, C_in=128, C_out=8, L=256)

    print("KERNEL_OK")
</pallas_src>

<mosaic_0001>
module attributes {stable_mosaic.version = 11 : i64} {
  func.func @_cat_fuse_kernel(%arg0: i32, %arg1: i32, %arg2: memref<1x8x128xf32, #tpu.memory_space<vmem>>, %arg3: memref<1x1x8x6xf32, #tpu.memory_space<vmem>>, %arg4: memref<8x56xbf16, #tpu.memory_space<vmem>>, %arg5: memref<8x1xf32, #tpu.memory_space<vmem>>, %arg6: memref<8x1xf32, #tpu.memory_space<vmem>>, %arg7: memref<1x8x128xf32, #tpu.memory_space<vmem>>) attributes {dimension_semantics = [#tpu.dimension_semantics<parallel>, #tpu.dimension_semantics<parallel>], iteration_bounds = array<i64: 2, 1>, scalar_prefetch = 0 : i64, scratch_operands = 0 : i64, tpu.core_type = #tpu.core_type<tc>, window_params = [{transform_indices = @transform_0, window_bounds = array<i64: 1, 8, 128>}, {transform_indices = @transform_1, window_bounds = array<i64: 1, 1, 8, 6>}, {pipeline_mode = #tpu.pipeline_mode<synchronous>, transform_indices = @transform_2, window_bounds = array<i64: 8, 56>}, {pipeline_mode = #tpu.pipeline_mode<synchronous>, transform_indices = @transform_3, window_bounds = array<i64: 8, 1>}, {pipeline_mode = #tpu.pipeline_mode<synchronous>, transform_indices = @transform_4, window_bounds = array<i64: 8, 1>}, {transform_indices = @transform_5, window_bounds = array<i64: 1, 8, 128>}]} {
    %0 = tpu.iota {dimensions = array<i32: 1>} : vector<8x128xi32>
    %c0 = arith.constant 0 : index
    %c0_0 = arith.constant 0 : index
    %c0_1 = arith.constant 0 : index
    %1 = vector.load %arg2[%c0, %c0_0, %c0_1] : memref<1x8x128xf32, #tpu.memory_space<vmem>>, vector<1x8x128xf32>
    %2 = vector.shape_cast %1 : vector<1x8x128xf32> to vector<8x128xf32>
    %c0_2 = arith.constant 0 : index
    %3 = arith.index_cast %arg1 : i32 to index
    %c0_3 = arith.constant 0 : index
    %c0_4 = arith.constant 0 : index
    %4 = vector.load %arg3[%c0_2, %3, %c0_3, %c0_4] : memref<1x1x8x6xf32, #tpu.memory_space<vmem>>, vector<1x1x8x6xf32>
    %5 = vector.shape_cast %4 : vector<1x1x8x6xf32> to vector<8x6xf32>
    %cst = arith.constant 0.000000e+00 : f32
    %6 = vector.broadcast %cst : f32 to vector<8x122xf32>
    %7 = tpu.concatenate %5, %6 in 1 : vector<8x6xf32>, vector<8x122xf32> -> vector<8x128xf32>
    %c3_i32 = arith.constant 3 : i32
    %8 = tpu.dynamic_rotate %2 by %c3_i32 dim 1 : vector<8x128xf32>, i32 -> vector<8x128xf32>
    %c3_i32_5 = arith.constant 3 : i32
    %9 = vector.broadcast %c3_i32_5 : i32 to vector<8x128xi32>
    %10 = arith.cmpi slt, %0, %9 : vector<8x128xi32>
    %11 = arith.select %10, %7, %8 : vector<8x128xi1>, vector<8x128xf32>
    %12 = arith.truncf %11 : vector<8x128xf32> to vector<8x128xbf16>
    %c2_i32 = arith.constant 2 : i32
    %13 = tpu.dynamic_rotate %2 by %c2_i32 dim 1 : vector<8x128xf32>, i32 -> vector<8x128xf32>
    %c127_i32 = arith.constant 127 : i32
    %14 = tpu.dynamic_rotate %7 by %c127_i32 dim 1 : vector<8x128xf32>, i32 -> vector<8x128xf32>
    %c2_i32_6 = arith.constant 2 : i32
    %15 = vector.broadcast %c2_i32_6 : i32 to vector<8x128xi32>
    %16 = arith.cmpi slt, %0, %15 : vector<8x128xi32>
    %17 = arith.select %16, %14, %13 : vector<8x128xi1>, vector<8x128xf32>
    %18 = arith.truncf %17 : vector<8x128xf32> to vector<8x128xbf16>
    %c1_i32 = arith.constant 1 : i32
    %19 = tpu.dynamic_rotate %2 by %c1_i32 dim 1 : vector<8x128xf32>, i32 -> vector<8x128xf32>
    %c126_i32 = arith.constant 126 : i32
    %20 = tpu.dynamic_rotate %7 by %c126_i32 dim 1 : vector<8x128xf32>, i32 -> vector<8x128xf32>
    %c1_i32_7 = arith.constant 1 : i32
    %21 = vector.broadcast %c1_i32_7 : i32 to vector<8x128xi32>
    %22 = arith.cmpi slt, %0, %21 : vector<8x128xi32>
    %23 = arith.select %22, %20, %19 : vector<8x128xi1>, vector<8x128xf32>
    %24 = arith.truncf %23 : vector<8x128xf32> to vector<8x128xbf16>
    %25 = arith.truncf %2 : vector<8x128xf32> to vector<8x128xbf16>
    %c127_i32_8 = arith.constant 127 : i32
    %26 = tpu.dynamic_rotate %2 by %c127_i32_8 dim 1 : vector<8x128xf32>, i32 -> vector<8x128xf32>
    %c124_i32 = arith.constant 124 : i32
    %27 = tpu.dynamic_rotate %7 by %c124_i32 dim 1 : vector<8x128xf32>, i32 -> vector<8x128xf32>
    %c127_i32_9 = arith.constant 127 : i32
    %28 = vector.broadcast %c127_i32_9 : i32 to vector<8x128xi32>
    %29 = arith.cmpi sge, %0, %28 : vector<8x128xi32>
    %30 = arith.select %29, %27, %26 : vector<8x128xi1>, vector<8x128xf32>
    %31 = arith.truncf %30 : vector<8x128xf32> to vector<8x128xbf16>
    %c126_i32_10 = arith.constant 126 : i32
    %32 = tpu.dynamic_rotate %2 by %c126_i32_10 dim 1 : vector<8x128xf32>, i32 -> vector<8x128xf32>
    %c123_i32 = arith.constant 123 : i32
    %33 = tpu.dynamic_rotate %7 by %c123_i32 dim 1 : vector<8x128xf32>, i32 -> vector<8x128xf32>
    %c126_i32_11 = arith.constant 126 : i32
    %34 = vector.broadcast %c126_i32_11 : i32 to vector<8x128xi32>
    %35 = arith.cmpi sge, %0, %34 : vector<8x128xi32>
    %36 = arith.select %35, %33, %32 : vector<8x128xi1>, vector<8x128xf32>
    %37 = arith.truncf %36 : vector<8x128xf32> to vector<8x128xbf16>
    %c125_i32 = arith.constant 125 : i32
    %38 = tpu.dynamic_rotate %2 by %c125_i32 dim 1 : vector<8x128xf32>, i32 -> vector<8x128xf32>
    %c122_i32 = arith.constant 122 : i32
    %39 = tpu.dynamic_rotate %7 by %c122_i32 dim 1 : vector<8x128xf32>, i32 -> vector<8x128xf32>
    %c125_i32_12 = arith.constant 125 : i32
    %40 = vector.broadcast %c125_i32_12 : i32 to vector<8x128xi32>
    %41 = arith.cmpi sge, %0, %40 : vector<8x128xi32>
    %42 = arith.select %41, %39, %38 : vector<8x128xi1>, vector<8x128xf32>
    %43 = arith.truncf %42 : vector<8x128xf32> to vector<8x128xbf16>
    %44 = tpu.concatenate %12, %18, %24, %25, %31, %37, %43 in 0 : vector<8x128xbf16>, vector<8x128xbf16>, vector<8x128xbf16>, vector<8x128xbf16>, vector<8x128xbf16>, vector<8x128xbf16>, vector<8x128xbf16> -> vector<56x128xbf16>
    %c0_13 = arith.constant 0 : index
    %c0_14 = arith.constant 0 : index
    %45 = vector.load %arg4[%c0_13, %c0_14] : memref<8x56xbf16, #tpu.memory_space<vmem>>, vector<8x56xbf16>
    %cst_15 = arith.constant dense<0.000000e+00> : vector<8x128xf32>
    %46 = tpu.matmul %45, %44, %cst_15 {dimension_numbers = #tpu.dot_dimension_numbers<[1], [0], [0], [1], [0, 0, 1, 1], [], []>} : vector<8x56xbf16>, vector<56x128xbf16>, vector<8x128xf32> -> vector<8x128xf32>
    %c0_16 = arith.constant 0 : index
    %c0_17 = arith.constant 0 : index
    %47 = vector.load %arg5[%c0_16, %c0_17] : memref<8x1xf32, #tpu.memory_space<vmem>>, vector<8x1xf32>
    %48 = vector.broadcast %47 : vector<8x1xf32> to vector<8x128xf32>
    %49 = arith.mulf %46, %48 : vector<8x128xf32>
    %c0_18 = arith.constant 0 : index
    %c0_19 = arith.constant 0 : index
    %50 = vector.load %arg6[%c0_18, %c0_19] : memref<8x1xf32, #tpu.memory_space<vmem>>, vector<8x1xf32>
    %51 = vector.broadcast %50 : vector<8x1xf32> to vector<8x128xf32>
    %52 = arith.addf %49, %51 : vector<8x128xf32>
    %cst_20 = arith.constant 0.000000e+00 : f32
    %53 = vector.broadcast %cst_20 : f32 to vector<8x128xf32>
    %54 = arith.cmpf oge, %52, %53 : vector<8x128xf32>
    %cst_21 = arith.constant 2.000000e-01 : f32
    %55 = vector.broadcast %cst_21 : f32 to vector<8x128xf32>
    %56 = arith.mulf %55, %52 : vector<8x128xf32>
    %57 = arith.select %54, %52, %56 : vector<8x128xi1>, vector<8x128xf32>
    %c0_22 = arith.constant 0 : index
    %c0_23 = arith.constant 0 : index
    %c0_24 = arith.constant 0 : index
    %58 = vector.load %arg7[%c0_22, %c0_23, %c0_24] : memref<1x8x128xf32, #tpu.memory_space<vmem>>, vector<1x8x128xf32>
    %59 = vector.shape_cast %58 : vector<1x8x128xf32> to vector<8x128xf32>
    %60 = vector.shape_cast %57 : vector<8x128xf32> to vector<1x8x128xf32>
    tpu.vector_store %arg7[%c0_22, %c0_23, %c0_24], %60 {strides = array<i32>} : memref<1x8x128xf32, #tpu.memory_space<vmem>>, vector<1x8x128xf32>,
    return
  }
  func.func @transform_0(%arg0: i32, %arg1: i32) -> (i32, i32, i32) {
    %c0_i32 = arith.constant 0 : i32
    %c0_i32_0 = arith.constant 0 : i32
    return %arg0, %c0_i32, %arg1 : i32, i32, i32
  }
  func.func @transform_1(%arg0: i32, %arg1: i32) -> (i32, i32, i32, i32) {
    %c0_i32 = arith.constant 0 : i32
    %c0_i32_0 = arith.constant 0 : i32
    %c0_i32_1 = arith.constant 0 : i32
    %c0_i32_2 = arith.constant 0 : i32
    return %arg0, %c0_i32, %c0_i32_0, %c0_i32_1 : i32, i32, i32, i32
  }
  func.func @transform_2(%arg0: i32, %arg1: i32) -> (i32, i32) {
    %c0_i32 = arith.constant 0 : i32
    %c0_i32_0 = arith.constant 0 : i32
    %c0_i32_1 = arith.constant 0 : i32
    return %c0_i32, %c0_i32_0 : i32, i32
  }
  func.func @transform_3(%arg0: i32, %arg1: i32) -> (i32, i32) {
    %c0_i32 = arith.constant 0 : i32
    %c0_i32_0 = arith.constant 0 : i32
    %c0_i32_1 = arith.constant 0 : i32
    return %c0_i32, %c0_i32_0 : i32, i32
  }
  func.func @transform_4(%arg0: i32, %arg1: i32) -> (i32, i32) {
    %c0_i32 = arith.constant 0 : i32
    %c0_i32_0 = arith.constant 0 : i32
    %c0_i32_1 = arith.constant 0 : i32
    return %c0_i32, %c0_i32_0 : i32, i32
  }
  func.func @transform_5(%arg0: i32, %arg1: i32) -> (i32, i32, i32) {
    %c0_i32 = arith.constant 0 : i32
    %c0_i32_0 = arith.constant 0 : i32
    return %arg0, %c0_i32, %arg1 : i32, i32, i32
  }
}

</mosaic_0001>

<llo_original>
// kernel: tpu_custom_call.1
$region0: #{tpu_custom_call.1}
  #allocation0 [shape = 'u32[]', space=smem, size = 0x4, offset = 0x4, fixed_abs, tag = 'smem constant byte address 0x4 - core index']
  #allocation1 [shape = 'u32[72,128]{1,0:T(1,128)}', space=vmem, size = 0x9000, scoped, tag = 'internal scratch']
  %s0 = inlined_call_operand.vmem [shape: f32[2,8,128], index: 0, kind: input, shape index: {}]
  %s1 = inlined_call_operand.vmem [shape: f32[2,1,8,6], index: 1, kind: input, shape index: {}]
  %s2 = inlined_call_operand.vmem [shape: bf16[8,56], index: 2, kind: input, shape index: {}]
  %s3 = inlined_call_operand.vmem [shape: f32[8,1], index: 3, kind: input, shape index: {}]
  %s4 = inlined_call_operand.vmem [shape: f32[8,1], index: 4, kind: input, shape index: {}]
  %s5 = inlined_call_operand.hbm [shape: f32[2,8,128], index: 5, kind: output, shape index: {}]
  %s6 = sld [smem:[#allocation0]]
  $region53: #{tpu_custom_call.1} parent=0
    _
  %s8 = ssub.s32 1, %s6
  %s9 = scalar_select 0, %s8, %s6
  $region1: #{tpu_custom_call.1} parent=0
    #allocation2 [shape = 'u8[8192]{0}', space=vmem, size = 0x2000, scoped, tag = 'output window, operand 0']
    #allocation3 [shape = 's32[2]{0}', space=sflag, size = 0x8, scoped, tag = 'scoped memory for tpu_custom_call.1']
    %10 = vsyncpa [#allocation3], 0
    %s11 = scalar_lea.sflag [#allocation3], 1
    %12 = vsyncpa %s11, 0
    loop: start=0, step=1, limit=4
    $region2: #{tpu_custom_call.1} parent=1 // loop_pre_header
      _
    $region3: #{tpu_custom_call.1} parent=1 // loop_header
      %s14 = sphi 0, %s18
      %p15 = scmp.ge.s32.totalorder %s14, 4
      %s21 = sphi 0, %s33
      %s22 = sphi 0, %s29
      %s23 = sphi 0, %s21
      %s24 = sphi 0, %s22
      %s25 = sphi 0, %s23
      %s26 = sphi 0, %s24
      %s38 = sphi 0, %s40
      %s41 = sphi 0, %s38
      %s42 = sphi 0, %s41
      %s58 = sphi 0, %s42
      %s64 = sphi 0, %s66
      %s67 = sphi 0, %s64
      %s68 = sphi 0, %s67
      %s84 = sphi 0, %s68
      %s88 = sphi 0, %s88
      %s90 = sphi 0, %s88
      %s91 = sphi 0, %s90
      %s105 = sphi 0, %s91
      %s109 = sphi 0, %s109
      %s111 = sphi 0, %s109
      %s112 = sphi 0, %s111
      %s126 = sphi 0, %s112
      %s130 = sphi 0, %s130
      %s132 = sphi 0, %s130
      %s133 = sphi 0, %s132
      %s147 = sphi 0, %s133
      %s155 = sphi 0, %s157
      %s158 = sphi 0, %s155
      %s159 = sphi 0, %s158
      %s175 = sphi 0, %s159
    $region4: #{tpu_custom_call.1} parent=1 // loop_header_branch
      %17 = sbr.rel (%p15) target = $region8
    $region5: #{tpu_custom_call.1} parent=1 // loop_body
      %s19 = ssub.s32 %s14, 1
      %s20 = ssub.s32 %s14, 2
      %s27 = sadd.s32 1, %s22
      %p28 = scmp.ge.s32.totalorder %s27, 1
      %s29 = scalar_select %p28, 0, %s27
      %s30 = sadd.s32 1, %s21
      %s31 = scalar_select %p28, %s30, %s21
      %p32 = scmp.ge.s32.totalorder %s31, 2
      %s33 = scalar_select %p32, 0, %s31
      %s34 = ssub.s32 %s21, %s33
      %s35 = ssub.s32 %s22, %s29
      %s36 = sor.u32 %s34, %s35
      %p37 = scmp.eq.s32.totalorder %s36, 0
      %s39 = sadd.s32 %s38, 1
      %s40 = scalar_select %p37, %s38, %s39
      %p43 = pneg %p37
      %p44 = scmp.eq.s32.totalorder %s14, 1
      %p45 = por %p43, %p44
      %p46 = scmp.ne.s32.totalorder %s38, %s41
      %p47 = scmp.eq.s32.totalorder %s14, 0
      %p48 = por %p46, %p47
      %p49 = scmp.ne.s32.totalorder %s38, %s41
      %p50 = scmp.eq.s32.totalorder %s19, 1
      %p51 = por %p49, %p50
      %p52 = scmp.ne.s32.totalorder %s41, %s42
      %p53 = scmp.eq.s32.totalorder %s19, 0
      %p54 = por %p52, %p53
      %p55 = scmp.ne.s32.totalorder %s41, %s42
      %p56 = scmp.eq.s32.totalorder %s20, 1
      %p57 = por %p55, %p56
      %p59 = scmp.ne.s32.totalorder %s42, %s58
      %p60 = scmp.eq.s32.totalorder %s20, 0
      %p61 = por %p59, %p60
      %s62 = ssub.s32 %s21, %s33
      %p63 = scmp.eq.s32.totalorder %s62, 0
      %s65 = sadd.s32 %s64, 1
      %s66 = scalar_select %p63, %s64, %s65
      %p69 = pneg %p63
      %p70 = scmp.eq.s32.totalorder %s14, 1
      %p71 = por %p69, %p70
      %p72 = scmp.ne.s32.totalorder %s64, %s67
      %p73 = scmp.eq.s32.totalorder %s14, 0
      %p74 = por %p72, %p73
      %p75 = scmp.ne.s32.totalorder %s64, %s67
      %p76 = scmp.eq.s32.totalorder %s19, 1
      %p77 = por %p75, %p76
      %p78 = scmp.ne.s32.totalorder %s67, %s68
      %p79 = scmp.eq.s32.totalorder %s19, 0
      %p80 = por %p78, %p79
      %p81 = scmp.ne.s32.totalorder %s67, %s68
      %p82 = scmp.eq.s32.totalorder %s20, 1
      %p83 = por %p81, %p82
      %p85 = scmp.ne.s32.totalorder %s68, %s84
      %p86 = scmp.eq.s32.totalorder %s20, 0
      %p87 = por %p85, %p86
      %s89 = sadd.s32 %s88, 1
      %p92 = scmp.eq.s32.totalorder %s14, 1
      %p93 = scmp.ne.s32.totalorder %s88, %s90
      %p94 = scmp.eq.s32.totalorder %s14, 0
      %p95 = por %p93, %p94
      %p96 = scmp.ne.s32.totalorder %s88, %s90
      %p97 = scmp.eq.s32.totalorder %s19, 1
      %p98 = por %p96, %p97
      %p99 = scmp.ne.s32.totalorder %s90, %s91
      %p100 = scmp.eq.s32.totalorder %s19, 0
      %p101 = por %p99, %p100
      %p102 = scmp.ne.s32.totalorder %s90, %s91
      %p103 = scmp.eq.s32.totalorder %s20, 1
      %p104 = por %p102, %p103
      %p106 = scmp.ne.s32.totalorder %s91, %s105
      %p107 = scmp.eq.s32.totalorder %s20, 0
      %p108 = por %p106, %p107
      %s110 = sadd.s32 %s109, 1
      %p113 = scmp.eq.s32.totalorder %s14, 1
      %p114 = scmp.ne.s32.totalorder %s109, %s111
      %p115 = scmp.eq.s32.totalorder %s14, 0
      %p116 = por %p114, %p115
      %p117 = scmp.ne.s32.totalorder %s109, %s111
      %p118 = scmp.eq.s32.totalorder %s19, 1
      %p119 = por %p117, %p118
      %p120 = scmp.ne.s32.totalorder %s111, %s112
      %p121 = scmp.eq.s32.totalorder %s19, 0
      %p122 = por %p120, %p121
      %p123 = scmp.ne.s32.totalorder %s111, %s112
      %p124 = scmp.eq.s32.totalorder %s20, 1
      %p125 = por %p123, %p124
      %p127 = scmp.ne.s32.totalorder %s112, %s126
      %p128 = scmp.eq.s32.totalorder %s20, 0
      %p129 = por %p127, %p128
      %s131 = sadd.s32 %s130, 1
      %p134 = scmp.eq.s32.totalorder %s14, 1
      %p135 = scmp.ne.s32.totalorder %s130, %s132
      %p136 = scmp.eq.s32.totalorder %s14, 0
      %p137 = por %p135, %p136
      %p138 = scmp.ne.s32.totalorder %s130, %s132
      %p139 = scmp.eq.s32.totalorder %s19, 1
      %p140 = por %p138, %p139
      %p141 = scmp.ne.s32.totalorder %s132, %s133
      %p142 = scmp.eq.s32.totalorder %s19, 0
      %p143 = por %p141, %p142
      %p144 = scmp.ne.s32.totalorder %s132, %s133
      %p145 = scmp.eq.s32.totalorder %s20, 1
      %p146 = por %p144, %p145
      %p148 = scmp.ne.s32.totalorder %s133, %s147
      %p149 = scmp.eq.s32.totalorder %s20, 0
      %p150 = por %p148, %p149
      %s151 = ssub.s32 %s21, %s33
      %s152 = ssub.s32 %s22, %s29
      %s153 = sor.u32 %s151, %s152
      %p154 = scmp.eq.s32.totalorder %s153, 0
      %s156 = sadd.s32 %s155, 1
      %s157 = scalar_select %p154, %s155, %s156
      %p160 = pneg %p154
      %p161 = scmp.eq.s32.totalorder %s14, 1
      %p162 = por %p160, %p161
      %p163 = scmp.ne.s32.totalorder %s155, %s158
      %p164 = scmp.eq.s32.totalorder %s14, 0
      %p165 = por %p163, %p164
      %p166 = scmp.ne.s32.totalorder %s155, %s158
      %p167 = scmp.eq.s32.totalorder %s19, 1
      %p168 = por %p166, %p167
      %p169 = scmp.ne.s32.totalorder %s158, %s159
      %p170 = scmp.eq.s32.totalorder %s19, 0
      %p171 = por %p169, %p170
      %p172 = scmp.ne.s32.totalorder %s158, %s159
      %p173 = scmp.eq.s32.totalorder %s20, 1
      %p174 = por %p172, %p173
      %p176 = scmp.ne.s32.totalorder %s159, %s175
      %p177 = scmp.eq.s32.totalorder %s20, 0
      %p178 = por %p176, %p177
      %p179 = scmp.le.s32.totalorder 1, %s14
      %p180 = scmp.lt.s32.totalorder %s14, 3
      %p181 = pnand %p179, %p180
      %p182 = pneg %p181
      // Predicated region
      $region9: #{tpu_custom_call.1} parent=5 // pred_check
        _
      $region10: #{tpu_custom_call.1} parent=5 // pred_check_branch
        %184 = sbr.rel (%p181) target = $region12
      $region11: #{tpu_custom_call.1} parent=5 // pred_region
        %s185 = ssub.s32 %s14, 1
        // Predicated region
        $region13: #{tpu_custom_call.1} parent=11 // pred_check
          %p186 = pneg %p101
        $region14: #{tpu_custom_call.1} parent=11 // pred_check_branch
          %188 = sbr.rel (%p186) target = $region16
        $region15: #{tpu_custom_call.1} parent=11 // pred_region
          _
        $region16: #{tpu_custom_call.1} parent=11 // pred_fallthru
          _
        // Predicated region
        $region17: #{tpu_custom_call.1} parent=11 // pred_check
          %p189 = pneg %p122
        $region18: #{tpu_custom_call.1} parent=11 // pred_check_branch
          %191 = sbr.rel (%p189) target = $region20
        $region19: #{tpu_custom_call.1} parent=11 // pred_region
          _
        $region20: #{tpu_custom_call.1} parent=11 // pred_fallthru
          _
        // Predicated region
        $region21: #{tpu_custom_call.1} parent=11 // pred_check
          %p192 = pneg %p143
        $region22: #{tpu_custom_call.1} parent=11 // pred_check_branch
          %194 = sbr.rel (%p192) target = $region24
        $region23: #{tpu_custom_call.1} parent=11 // pred_region
          _
        $region24: #{tpu_custom_call.1} parent=11 // pred_fallthru
          _
      $region12: #{tpu_custom_call.1} parent=5 // pred_fallthru
        _
      %p195 = scmp.lt.s32.totalorder %s14, 2
      // Predicated region
      $region25: #{tpu_custom_call.1} parent=5 // pred_check
        %p196 = pneg %p195
      $region26: #{tpu_custom_call.1} parent=5 // pred_check_branch
        %198 = sbr.rel (%p196) target = $region28
      $region27: #{tpu_custom_call.1} parent=5 // pred_region
        // Predicated region
        $region29: #{tpu_custom_call.1} parent=27 // pred_check
          %p199 = pneg %p48
        $region30: #{tpu_custom_call.1} parent=27 // pred_check_branch
          %201 = sbr.rel (%p199) target = $region32
        $region31: #{tpu_custom_call.1} parent=27 // pred_region
          %p202 = scmp.lt.s32.totalorder %s21, 1
          %s203 = scalar_select %p202, %s21, 1
          %p204 = scmp.lt.s32.totalorder %s22, 0
          %s205 = scalar_select %p204, %s22, 0
          %s206 = sadd.s32 %s205, %s203
          %s207 = smul.addr %s206, 8
          %s208 = scalar_lea.vmem %s0, %s207
        $region32: #{tpu_custom_call.1} parent=27 // pred_fallthru
          _
        // Predicated region
        $region33: #{tpu_custom_call.1} parent=27 // pred_check
          %p209 = pneg %p74
        $region34: #{tpu_custom_call.1} parent=27 // pred_check_branch
          %211 = sbr.rel (%p209) target = $region36
        $region35: #{tpu_custom_call.1} parent=27 // pred_region
          %p212 = scmp.lt.s32.totalorder %s21, 1
          %s213 = scalar_select %p212, %s21, 1
          %s214 = smul.addr %s213, 8
          %s215 = scalar_lea.vmem %s1, %s214
        $region36: #{tpu_custom_call.1} parent=27 // pred_fallthru
          _
      $region28: #{tpu_custom_call.1} parent=5 // pred_fallthru
        _
      %p216 = scmp.le.s32.totalorder 1, %s14
      %p217 = scmp.lt.s32.totalorder %s14, 3
      %p218 = pnand %p216, %p217
      %p219 = pneg %p218
      // Predicated region
      $region37: #{tpu_custom_call.1} parent=5 // pred_check
        _
      $region38: #{tpu_custom_call.1} parent=5 // pred_check_branch
        %221 = sbr.rel (%p218) target = $region40
      $region39: #{tpu_custom_call.1} parent=5 // pred_region
        %s222 = ssub.s32 %s14, 1
        %p223 = scmp.lt.s32.totalorder %s23, 1
        %s224 = scalar_select %p223, %s23, 1
        %p225 = scmp.lt.s32.totalorder %s24, 0
        %s226 = scalar_select %p225, %s24, 0
        %s227 = sadd.s32 %s226, %s224
        %s228 = smul.addr %s227, 8
        %s229 = scalar_lea.vmem %s0, %s228
        %p230 = pneg %p54
        %p231 = pneg %p51
        %p232 = scmp.lt.s32.totalorder %s23, 1
        %s233 = scalar_select %p232, %s23, 1
        %s234 = smul.addr %s233, 8
        %s235 = scalar_lea.vmem %s1, %s234
        %p236 = pneg %p80
        %p237 = pneg %p77
        %p238 = pneg %p101
        %p239 = pneg %p98
        %p240 = pneg %p122
        %p241 = pneg %p119
        %p242 = pneg %p143
        %p243 = pneg %p140
        %p244 = pneg %p171
        %p245 = pneg %p168
        %s246 = sand.u32 %s158, 1
        %s247 = scalar_lea.sflag [#allocation3], %s246
        %s248 = sand.u32 %s158, 1
        %s249 = smul.addr %s248, 8
        %s250 = scalar_lea.vmem [#allocation2], %s249
        %p251 = scmp.lt.s32.totalorder %s23, 1
        %s252 = scalar_select %p251, %s23, 1
        %p253 = scmp.lt.s32.totalorder %s24, 0
        %s254 = scalar_select %p253, %s24, 0
        %s255 = sadd.s32 %s254, %s252
        %s256 = smul.addr %s255, 8
        %s257 = scalar_lea.vmem %s0, %s256
        %p258 = scmp.lt.s32.totalorder %s23, 1
        %s259 = scalar_select %p258, %s23, 1
        %s260 = smul.addr %s259, 8
        %s261 = scalar_lea.vmem %s1, %s260
        %v263 = vlaneseq
        %v264 = vand.u32 %v263, 127
        %v265 = vld [vmem:[%s257] sm:$0xff]
        %s266 = smul.u32 %s24, 8
        %s267 = scalar_lea.vmem %s261, %s266
        %v268 = vld [vmem:[%s267] sm:$0xff]
        %vm269 = vcmask 48128
        %v270 = vsel %vm269, %v268, 0.0
        %271 = vrot.lane.b32.xlu0 %v265, 3
        %v272 = vpop.permute.xlu0 %271
        %vm273 = vcmp.lt.s32.totalorder %v264, 3
        %v274 = vsel %vm273, %v270, %v272
        %v275 = vpack.c.bf16 %v274, %v274
        %276 = vrot.lane.b32.xlu0 %v265, 2
        %v277 = vpop.permute.xlu0 %276
        %278 = vrot.lane.b32.xlu0 %v270, 127
        %v279 = vpop.permute.xlu0 %278
        %vm280 = vcmp.lt.s32.totalorder %v264, 2
        %v281 = vsel %vm280, %v279, %v277
        %v282 = vpack.c.bf16 %v281, %v281
        %283 = vrot.lane.b32.xlu0 %v265, 1
        %v284 = vpop.permute.xlu0 %283
        %285 = vrot.lane.b32.xlu0 %v270, 126
        %v286 = vpop.permute.xlu0 %285
        %vm287 = vcmp.lt.s32.totalorder %v264, 1
        %v288 = vsel %vm287, %v286, %v284
        %v289 = vpack.c.bf16 %v288, %v288
        %v290 = vpack.c.bf16 %v265, %v265
        %291 = vrot.lane.b32.xlu0 %v265, 127
        %v292 = vpop.permute.xlu0 %291
        %293 = vrot.lane.b32.xlu0 %v270, 124
        %v294 = vpop.permute.xlu0 %293
        %vm295 = vcmp.ge.s32.totalorder %v264, 127
        %v296 = vsel %vm295, %v294, %v292
        %v297 = vpack.c.bf16 %v296, %v296
        %298 = vrot.lane.b32.xlu0 %v265, 126
        %v299 = vpop.permute.xlu0 %298
        %300 = vrot.lane.b32.xlu0 %v270, 123
        %v301 = vpop.permute.xlu0 %300
        %vm302 = vcmp.ge.s32.totalorder %v264, 126
        %v303 = vsel %vm302, %v301, %v299
        %v304 = vpack.c.bf16 %v303, %v303
        %305 = vrot.lane.b32.xlu0 %v265, 125
        %v306 = vpop.permute.xlu0 %305
        %307 = vrot.lane.b32.xlu0 %v270, 122
        %v308 = vpop.permute.xlu0 %307
        %vm309 = vcmp.ge.s32.totalorder %v264, 125
        %v310 = vsel %vm309, %v308, %v306
        %v311 = vpack.c.bf16 %v310, %v310
        %v313 = vunpack.c.l.b16 %v282
        %v314 = vpack.c.b16 %v313, %v313
        %v316 = vunpack.c.l.b16 %v290
        %v317 = vpack.c.b16 %v316, %v316
        %v319 = vunpack.c.l.b16 %v304
        %v320 = vpack.c.b16 %v319, %v319
        %vm321 = vcmask 1043456
        %v324 = vsel %vm321, %v275, %v314
        %v328 = vsel %vm321, %v289, %v317
        %v332 = vsel %vm321, %v297, %v320
        %v334 = vld [vmem:[%s2] sm:$0xf]
        %vm335 = vcmask 457728
        %v337 = vsel %vm335, %v334, 0
        %v340 = vsel %vm321, %v311, 0
        %342 = vmatpush.bf16.msra.mxu0 0
        %343 = vmatpush.bf16.msra.mxu0 0
        %344 = vmatpush.bf16.msra.mxu0 0
        %345 = vmatpush.bf16.msra.mxu0 0
        %346 = vmatpush.bf16.msra.mxu0 %v340
        %347 = vmatpush.bf16.msra.mxu0 %v332
        %348 = vmatpush.bf16.msra.mxu0 %v328
        %349 = vmatpush.bf16.msra.mxu0 %v324
        %350 = vmatmul.bf16.gmra.mxu0 %v337
        %v351 = vpop.f32.mrf.mxu0
        %v352 = vadd.f32 0.0, %v351
        %v353 = vpop.f32.mrf.mxu0
        %354 = vdwg.mxu0
        %v355 = vld [vmem:[%s3] sm:$0xff]
        %357 = vset.pattern.permute.xlu0 0
        %358 = vperm.xlu0 %357, %v355
        %v359 = vpop.permute.xlu0 %358
        %v361 = vmul.f32 %v352, %v359
        %v362 = vld [vmem:[%s4] sm:$0xff]
        %364 = vset.pattern.permute.xlu0 0
        %365 = vperm.xlu0 %364, %v362
        %v366 = vpop.permute.xlu0 %365
        %v368 = vadd.f32 %v361, %v366
        %vm369 = vcmp.ge.f32.partialorder %v368, 0.0
        %v370 = vmul.f32 %v368, 0.2
        %v371 = vsel %vm369, %v368, %v370
        %372 = vst [vmem:[%s250] sm:$0xff] %v371
        %s373 = sand.u32 %s158, 1
        %s374 = scalar_lea.sflag [#allocation3], %s373
        %s375 = sand.u32 %s158, 1
        %s376 = smul.addr %s375, 8
        %s377 = scalar_lea.vmem [#allocation2], %s376
        // Predicated region
        $region41: #{tpu_custom_call.1} parent=39 // pred_check
          %p378 = pneg %p168
        $region42: #{tpu_custom_call.1} parent=39 // pred_check_branch
          %380 = sbr.rel (%p378) target = $region44
        $region43: #{tpu_custom_call.1} parent=39 // pred_region
          %382 = vsyncadd %s374, 0
          %s383 = sadd.s32 %s24, %s23
          %s384 = smul.addr %s383, 8
          %s385 = scalar_lea.hbm %s5, %s384
          %s387 = sshll.u32 %s377, 4
          %s388 = int_to_ptr.vmem [resolvable:$true] %s387
          %s389 = sshll.u32 %s385, 4
          %s390 = int_to_ptr.hbm [resolvable:$true] %s389
          %392 = dma.vmem_to_hbm [thread:$0]  %s388, 128, %s390, %s374
        $region44: #{tpu_custom_call.1} parent=39 // pred_fallthru
          _
      $region40: #{tpu_custom_call.1} parent=5 // pred_fallthru
        _
      %p393 = scmp.le.s32.totalorder 2, %s14
      // Predicated region
      $region45: #{tpu_custom_call.1} parent=5 // pred_check
        %p394 = pneg %p393
      $region46: #{tpu_custom_call.1} parent=5 // pred_check_branch
        %396 = sbr.rel (%p394) target = $region48
      $region47: #{tpu_custom_call.1} parent=5 // pred_region
        %s397 = ssub.s32 %s14, 2
        // Predicated region
        $region49: #{tpu_custom_call.1} parent=47 // pred_check
          %p398 = pneg %p174
        $region50: #{tpu_custom_call.1} parent=47 // pred_check_branch
          %400 = sbr.rel (%p398) target = $region52
        $region51: #{tpu_custom_call.1} parent=47 // pred_region
          %s401 = sand.u32 %s159, 1
          %s402 = scalar_lea.sflag [#allocation3], %s401
          %s403 = sand.u32 %s159, 1
          %s404 = smul.addr %s403, 8
          %s405 = scalar_lea.vmem [#allocation2], %s404
          %407 = dma.done %s402, 128
        $region52: #{tpu_custom_call.1} parent=47 // pred_fallthru
          _
      $region48: #{tpu_custom_call.1} parent=5 // pred_fallthru
        _
    $region6: #{tpu_custom_call.1} parent=1 // loop_footer
      %s18 = sadd.s32 1, %s14
    $region7: #{tpu_custom_call.1} parent=1 // loop_footer_branch
      %13 = sbr.rel target = $region3
    $region8: #{tpu_custom_call.1} parent=1 // loop_exit
      _
    %408 = vsyncpa [#allocation3], 1
    %s409 = scalar_lea.sflag [#allocation3], 1
    %410 = vsyncpa %s409, 1

</llo_original>
